<compile_context>
chip_gen: v5e
topology: v5e:2x2
jax: 0.10.0
libtpu: 0.0.40
codegen_flags: <defaults>
</compile_context>

<pallas_src>
import functools

import jax
import jax.numpy as jnp
from jax.experimental import pallas as pl
from jax.experimental.pallas import tpu as pltpu

_LANE = 128            # lane width: minor dim of the mask slab
_SUBLANE_I8 = 32       # int8 packed tile is (32, 128)
_MAX_TILE_ROWS = 8192  # 8192 * 128 int8 = 1 MiB per block


def _round_up(x, m):
    return ((x + m - 1) // m) * m


def _edge_dropout_mask_kernel(seed_ref, mask_ref, *, threshold):
    """Write the int8 keep-mask for this tile; no edge data is read."""
    rows, cols = mask_ref.shape            # (tile_rows, 128), static
    assert cols == _LANE

    # --- scalar work (once per tile, scalar unit) --------------------------
    tile = pl.program_id(0).astype(jnp.uint32)
    seed_u = seed_ref[0].astype(jnp.uint32)
    # splitmix32-style finalizer on the seed: different seeds give
    # decorrelated (not index-shifted) streams.
    s = seed_u * jnp.uint32(0x9E3779B9)
    s = s ^ (s >> jnp.uint32(16))
    s = s * jnp.uint32(0x85EBCA6B)
    s = s ^ (s >> jnp.uint32(13))
    s = s * jnp.uint32(0xC2B2AE35)
    s = s ^ (s >> jnp.uint32(16))
    base = tile * jnp.uint32(rows * cols)   # global element offset of this tile

    # --- vector work (~14 VPU ops per vreg) --------------------------------
    row_i = jax.lax.broadcasted_iota(jnp.uint32, (rows, cols), 0)
    col_i = jax.lax.broadcasted_iota(jnp.uint32, (rows, cols), 1)
    # Global element index (grid-invariant): row*128 + col + base.
    idx = (row_i << jnp.uint32(7)) + (col_i + base)

    # murmur3-fmix32 of (idx ^ mixed_seed) -> uniform uint32 bits.
    z = idx ^ s
    z = z ^ (z >> jnp.uint32(16))
    z = z * jnp.uint32(0x7FEB352D)
    z = z ^ (z >> jnp.uint32(15))
    z = z * jnp.uint32(0x846CA68B)
    z = z ^ (z >> jnp.uint32(16))

    # keep with probability keep_prob: single unsigned compare.
    mask_ref[...] = (z < jnp.uint32(threshold)).astype(jnp.int8)


def _keep_mask_pallas(num_edges, seed, threshold):
    """Return an int8 keep mask of shape (num_edges,) (1 = keep)."""
    rows = max(1, pl.cdiv(num_edges, _LANE))
    rows_pad = _round_up(rows, _SUBLANE_I8)          # only pad to the int8 tile
    # Aim for >= 4 grid steps (megacore / v7x sharding) but cap blocks at 1 MiB.
    tile_rows = max(_SUBLANE_I8,
                    min(_MAX_TILE_ROWS,
                        _round_up(pl.cdiv(rows_pad, 4), _SUBLANE_I8)))
    grid = pl.cdiv(rows_pad, tile_rows)              # partial last block is OK

    seed_arr = jnp.asarray([seed], dtype=jnp.int32)
    mask2d = pl.pallas_call(
        functools.partial(_edge_dropout_mask_kernel, threshold=threshold),
        out_shape=jax.ShapeDtypeStruct((rows_pad, _LANE), jnp.int8),
        grid=(grid,),
        in_specs=[pl.BlockSpec(memory_space=pltpu.MemorySpace.SMEM)],  # seed
        out_specs=pl.BlockSpec((tile_rows, _LANE), lambda i: (i, 0)),
        compiler_params=pltpu.CompilerParams(
            dimension_semantics=("parallel",)),      # independent tiles
    )(seed_arr)
    return mask2d.reshape(-1)[:num_edges]


def edge_dropout(edge_index, edge_weight, *, keep_prob=0.5, seed=0,
                 training=True):
    """JAX/Pallas EdgeDropout.forward.

    Returns (edge_index_out, edge_weight_out, num_kept).  In training mode the
    kept edges occupy the first `num_kept` entries (same relative order as the
    PyTorch boolean-mask compaction); the tail is zero padding.
    """
    assert keep_prob > 0
    e = edge_weight.shape[0]
    if (not training) or keep_prob >= 1.0:
        # Eval / keep_all bypass: no kernel call, no extra HBM pass.
        return edge_index, edge_weight, jnp.asarray(e, jnp.int32)

    # P(keep) = keep_prob via one unsigned compare; clamp so keep_prob ~= 1.0
    # cannot wrap uint32(2**32) -> 0 (which would silently drop every edge).
    threshold = min(int(round(keep_prob * 4294967296.0)), 4294967295)
    inv_keep = jnp.float32(1.0 / keep_prob)

    keep_i8 = _keep_mask_pallas(e, seed, threshold)
    keep = keep_i8.astype(bool)

    # Scaling + zeroing outside the kernel; XLA fuses it with the sort prep.
    w_scaled = jnp.where(keep, edge_weight.astype(jnp.float32) * inv_keep,
                         jnp.float32(0.0))

    # Stable key-payload sort compaction: kept edges (key 0) move to the front
    # in original relative order, dropped edges (key 1) go to the tail.
    drop_key = jnp.int32(1) - keep_i8.astype(jnp.int32)
    _, ew_sorted, r0_sorted, r1_sorted = jax.lax.sort(
        (drop_key, w_scaled, edge_index[0], edge_index[1]),
        dimension=0, is_stable=True, num_keys=1)

    num_kept = jnp.sum(keep_i8.astype(jnp.int32))
    valid = jnp.arange(e, dtype=jnp.int32) < num_kept
    edge_index_out = jnp.where(valid[None, :],
                               jnp.stack([r0_sorted, r1_sorted]),
                               jnp.zeros((), edge_index.dtype))
    edge_weight_out = ew_sorted                      # dropped entries already 0
    return edge_index_out, edge_weight_out, num_kept


if __name__ == "__main__":
    key = jax.random.PRNGKey(0)
    k1, k2 = jax.random.split(key)

    E = 256          # number of edges
    N_NODES = 32
    KEEP_PROB = 0.5

    edge_index = jax.random.randint(k1, (2, E), 0, N_NODES, dtype=jnp.int32)
    edge_weight = jax.random.uniform(k2, (E,), dtype=jnp.float32,
                                     minval=0.1, maxval=1.0)

    ei_out, ew_out, n_kept = edge_dropout(
        edge_index, edge_weight, keep_prob=KEEP_PROB, seed=42, training=True)
    jax.block_until_ready((ei_out, ew_out, n_kept))

    n = int(n_kept)
    assert ei_out.shape == (2, E) and ew_out.shape == (E,)
    assert 0 < n < E

    # Every kept weight must equal some original weight / keep_prob.
    kept_vals = ew_out[:n]
    orig_scaled = edge_weight / KEEP_PROB
    diffs = jnp.abs(kept_vals[:, None] - orig_scaled[None, :])
    assert bool(jnp.all(jnp.min(diffs, axis=1) < 1e-5))
    # Tail of the weight buffer is zero padding.
    assert bool(jnp.all(ew_out[n:] == 0.0))
    # Kept edge indices are valid node ids.
    assert bool(jnp.all((ei_out[:, :n] >= 0) & (ei_out[:, :n] < N_NODES)))

    # Eval mode passes inputs through unchanged.
    ei_eval, ew_eval, n_eval = edge_dropout(
        edge_index, edge_weight, keep_prob=KEEP_PROB, seed=42, training=False)
    assert int(n_eval) == E and bool(jnp.all(ew_eval == edge_weight))

    print("KERNEL_OK")
</pallas_src>

<mosaic_0001>
module attributes {stable_mosaic.version = 11 : i64} {
  func.func @_edge_dropout_mask_kernel(%arg0: i32, %arg1: memref<1xi32, #tpu.memory_space<smem>>, %arg2: memref<32x128xi8, #tpu.memory_space<vmem>>) attributes {dimension_semantics = [#tpu.dimension_semantics<parallel>], iteration_bounds = array<i64: 1>, scalar_prefetch = 0 : i64, scratch_operands = 0 : i64, tpu.core_type = #tpu.core_type<tc>, window_params = [{transform_indices = @transform_0, window_bounds = array<i64: 1>}, {transform_indices = @transform_1, window_bounds = array<i64: 32, 128>}]} {
    %c0 = arith.constant 0 : index
    %0 = memref.load %arg1[%c0] : memref<1xi32, #tpu.memory_space<smem>>
    %c-1640531527_i32 = arith.constant -1640531527 : i32
    %1 = arith.muli %0, %c-1640531527_i32 : i32
    %c16_i32 = arith.constant 16 : i32
    %2 = arith.shrui %1, %c16_i32 : i32
    %3 = arith.xori %1, %2 : i32
    %c-2048144789_i32 = arith.constant -2048144789 : i32
    %4 = arith.muli %3, %c-2048144789_i32 : i32
    %c13_i32 = arith.constant 13 : i32
    %5 = arith.shrui %4, %c13_i32 : i32
    %6 = arith.xori %4, %5 : i32
    %c-1028477387_i32 = arith.constant -1028477387 : i32
    %7 = arith.muli %6, %c-1028477387_i32 : i32
    %c16_i32_0 = arith.constant 16 : i32
    %8 = arith.shrui %7, %c16_i32_0 : i32
    %9 = arith.xori %7, %8 : i32
    %c4096_i32 = arith.constant 4096 : i32
    %10 = arith.muli %arg0, %c4096_i32 : i32
    %11 = tpu.iota {dimensions = array<i32: 0>} : vector<32x128xi32>
    %12 = tpu.iota {dimensions = array<i32: 1>} : vector<32x128xi32>
    %c7_i32 = arith.constant 7 : i32
    %13 = vector.broadcast %c7_i32 : i32 to vector<32x128xi32>
    %14 = arith.shli %11, %13 : vector<32x128xi32>
    %15 = vector.broadcast %10 : i32 to vector<32x128xi32>
    %16 = arith.addi %12, %15 : vector<32x128xi32>
    %17 = arith.addi %14, %16 : vector<32x128xi32>
    %18 = vector.broadcast %9 : i32 to vector<32x128xi32>
    %19 = arith.xori %17, %18 : vector<32x128xi32>
    %c16_i32_1 = arith.constant 16 : i32
    %20 = vector.broadcast %c16_i32_1 : i32 to vector<32x128xi32>
    %21 = arith.shrui %19, %20 : vector<32x128xi32>
    %22 = arith.xori %19, %21 : vector<32x128xi32>
    %c2146121005_i32 = arith.constant 2146121005 : i32
    %23 = vector.broadcast %c2146121005_i32 : i32 to vector<32x128xi32>
    %24 = arith.muli %22, %23 : vector<32x128xi32>
    %c15_i32 = arith.constant 15 : i32
    %25 = vector.broadcast %c15_i32 : i32 to vector<32x128xi32>
    %26 = arith.shrui %24, %25 : vector<32x128xi32>
    %27 = arith.xori %24, %26 : vector<32x128xi32>
    %c-2073254261_i32 = arith.constant -2073254261 : i32
    %28 = vector.broadcast %c-2073254261_i32 : i32 to vector<32x128xi32>
    %29 = arith.muli %27, %28 : vector<32x128xi32>
    %c16_i32_2 = arith.constant 16 : i32
    %30 = vector.broadcast %c16_i32_2 : i32 to vector<32x128xi32>
    %31 = arith.shrui %29, %30 : vector<32x128xi32>
    %32 = arith.xori %29, %31 : vector<32x128xi32>
    %c-2147483648_i32 = arith.constant -2147483648 : i32
    %33 = vector.broadcast %c-2147483648_i32 : i32 to vector<32x128xi32>
    %34 = arith.cmpi ult, %32, %33 : vector<32x128xi32>
    %35 = arith.extui %34 : vector<32x128xi1> to vector<32x128xi8>
    %c0_3 = arith.constant 0 : index
    %c0_4 = arith.constant 0 : index
    %36 = vector.load %arg2[%c0_3, %c0_4] : memref<32x128xi8, #tpu.memory_space<vmem>>, vector<32x128xi8>
    tpu.vector_store %arg2[%c0_3, %c0_4], %35 {strides = array<i32>} : memref<32x128xi8, #tpu.memory_space<vmem>>, vector<32x128xi8>,
    return
  }
  func.func @transform_0(%arg0: i32) -> i32 {
    %c0_i32 = arith.constant 0 : i32
    %c0_i32_0 = arith.constant 0 : i32
    return %c0_i32 : i32
  }
  func.func @transform_1(%arg0: i32) -> (i32, i32) {
    %c0_i32 = arith.constant 0 : i32
    %c0_i32_0 = arith.constant 0 : i32
    return %arg0, %c0_i32 : i32, i32
  }
}

</mosaic_0001>

<llo_original>
// kernel: tpu_custom_call.1
$region0: #{tpu_custom_call.1}
  #allocation0 [shape = 'u32[]', space=smem, size = 0x4, offset = 0x4, fixed_abs, tag = 'smem constant byte address 0x4 - core index']
  #allocation1 [shape = 'u32[72,128]{1,0:T(1,128)}', space=vmem, size = 0x9000, scoped, tag = 'internal scratch']
  #allocation2 [shape = 's32[1]{0:T(128)S(6)}', space=smem, size = 0x200, scoped, tag = 'scoped memory for tpu_custom_call.1']
  %s0 = inlined_call_operand.<no memory space> [shape: s32[1], index: 0, kind: input, shape index: {}]
  %s1 = inlined_call_operand.hbm [shape: s8[32,128], index: 1, kind: output, shape index: {}]
  %s2 = sld [smem:[#allocation0]]
  $region14: #{tpu_custom_call.1} parent=0
    _
  %s4 = ssub.s32 1, %s2
  %s5 = scalar_select 0, %s4, %s2
  %6 = sst [smem:[#allocation2]] %s0
  $region1: #{tpu_custom_call.1} parent=0
    #allocation3 [shape = 'u8[4096]{0}', space=vmem, size = 0x1000, scoped, tag = 'output window, operand 0, single buffered']
    #allocation4 [shape = 's32[1]{0}', space=sflag, size = 0x4, scoped, tag = 'scoped memory for tpu_custom_call.1']
    %7 = vsyncpa [#allocation4], 0
    // Predicated region
    $region2: #{tpu_custom_call.1} parent=1 // pred_check
      _
    $region3: #{tpu_custom_call.1} parent=1 // pred_check_branch
      %9 = sbr.rel (0) target = $region5
    $region4: #{tpu_custom_call.1} parent=1 // pred_region
      _
    $region5: #{tpu_custom_call.1} parent=1 // pred_fallthru
      _
    %s12 = sld [smem:[#allocation2]]
    %s13 = smul.u32 %s12, 2654435769
    %s14 = sshrl.u32 %s13, 16
    %s15 = sxor.u32 %s13, %s14
    %s16 = smul.u32 %s15, 2246822507
    %s17 = sshrl.u32 %s16, 13
    %s18 = sxor.u32 %s16, %s17
    %s19 = smul.u32 %s18, 3266489909
    %s20 = sshrl.u32 %s19, 16
    %s21 = sxor.u32 %s19, %s20
    %s22 = smul.u32 0, 4096
    %v23 = vlaneseq
    %v24 = vshrl.u32 %v23, 7
    %v25 = vadd.s32 %v24, 8
    %v26 = vadd.s32 %v24, 16
    %v27 = vadd.s32 %v24, 24
    %v28 = vlaneseq
    %v29 = vand.u32 %v28, 127
    %v30 = vshll.u32 %v24, 7
    %v31 = vshll.u32 %v25, 7
    %v32 = vshll.u32 %v26, 7
    %v33 = vshll.u32 %v27, 7
    %v34 = vstv %s22
    %v35 = vadd.s32 %v29, %v34
    %v36 = vadd.s32 %v30, %v35
    %v37 = vadd.s32 %v31, %v35
    %v38 = vadd.s32 %v32, %v35
    %v39 = vadd.s32 %v33, %v35
    %v40 = vstv %s21
    %v41 = vxor.u32 %v36, %v40
    %v42 = vxor.u32 %v37, %v40
    %v43 = vxor.u32 %v38, %v40
    %v44 = vxor.u32 %v39, %v40
    %v45 = vshrl.u32 %v41, 16
    %v46 = vshrl.u32 %v42, 16
    %v47 = vshrl.u32 %v43, 16
    %v48 = vshrl.u32 %v44, 16
    %v49 = vxor.u32 %v41, %v45
    %v50 = vxor.u32 %v42, %v46
    %v51 = vxor.u32 %v43, %v47
    %v52 = vxor.u32 %v44, %v48
    %v53 = vmul.u32 %v49, 2146121005
    %v54 = vmul.u32 %v50, 2146121005
    %v55 = vmul.u32 %v51, 2146121005
    %v56 = vmul.u32 %v52, 2146121005
    %v57 = vshrl.u32 %v53, 15
    %v58 = vshrl.u32 %v54, 15
    %v59 = vshrl.u32 %v55, 15
    %v60 = vshrl.u32 %v56, 15
    %v61 = vxor.u32 %v53, %v57
    %v62 = vxor.u32 %v54, %v58
    %v63 = vxor.u32 %v55, %v59
    %v64 = vxor.u32 %v56, %v60
    %v65 = vmul.u32 %v61, 2221713035
    %v66 = vmul.u32 %v62, 2221713035
    %v67 = vmul.u32 %v63, 2221713035
    %v68 = vmul.u32 %v64, 2221713035
    %v69 = vshrl.u32 %v65, 16
    %v70 = vshrl.u32 %v66, 16
    %v71 = vshrl.u32 %v67, 16
    %v72 = vshrl.u32 %v68, 16
    %v73 = vxor.u32 %v65, %v69
    %v74 = vxor.u32 %v66, %v70
    %v75 = vxor.u32 %v67, %v71
    %v76 = vxor.u32 %v68, %v72
    %v77 = vadd.s32 %v73, 2147483648
    %vm79 = vcmp.lt.s32.totalorder %v77, 0
    %v80 = vadd.s32 %v74, 2147483648
    %vm82 = vcmp.lt.s32.totalorder %v80, 0
    %v83 = vadd.s32 %v75, 2147483648
    %vm85 = vcmp.lt.s32.totalorder %v83, 0
    %v86 = vadd.s32 %v76, 2147483648
    %vm88 = vcmp.lt.s32.totalorder %v86, 0
    %vm89 = vmpackc.low %vm82, %vm79
    %vm90 = vmpackc.low %vm88, %vm85
    %v91 = vsel %vm89, 16711935, 0
    %v92 = vsel %vm90, 16711935, 0
    %v93 = vpack.c.b8 %v92, %v91
    %vm94 = vnez %v93
    %v95 = vsel %vm94, 16843009, 0
    %96 = vst [vmem:[#allocation3] sm:$0xff] %v95
    // Predicated region
    $region6: #{tpu_custom_call.1} parent=1 // pred_check
      _
    $region7: #{tpu_custom_call.1} parent=1 // pred_check_branch
      %98 = sbr.rel (0) target = $region9
    $region8: #{tpu_custom_call.1} parent=1 // pred_region
      %100 = vsyncadd [#allocation4], 0
      %s102 = sshll.u32 [#allocation3], 4
      %s103 = int_to_ptr.vmem [resolvable:$true] %s102
      %s104 = sshll.u32 %s1, 4
      %s105 = int_to_ptr.hbm [resolvable:$true] %s104
      %107 = dma.vmem_to_hbm [thread:$0]  %s103, 128, %s105, [#allocation4]
    $region9: #{tpu_custom_call.1} parent=1 // pred_fallthru
      _
    // Predicated region
    $region10: #{tpu_custom_call.1} parent=1 // pred_check
      _
    $region11: #{tpu_custom_call.1} parent=1 // pred_check_branch
      %109 = sbr.rel (0) target = $region13
    $region12: #{tpu_custom_call.1} parent=1 // pred_region
      %111 = dma.done [#allocation4], 128
    $region13: #{tpu_custom_call.1} parent=1 // pred_fallthru
      _
    %112 = vsyncpa [#allocation4], 1

</llo_original>
